<compile_context>
chip_gen: v6e
topology: v6e:2x2x1
jax: 0.10.0
libtpu: 0.0.40
codegen_flags: <defaults>
</compile_context>

<pallas_src>
import functools

import jax
import jax.numpy as jnp
from jax.experimental import pallas as pl
from jax.experimental.pallas import tpu as pltpu


def _round_up(x: int, m: int) -> int:
    return ((x + m - 1) // m) * m


def _pick_divisor(full: int, candidates) -> int:
    for c in candidates:
        if full % c == 0:
            return c
    return full


# ---------------------------------------------------------------------------
# One-time parameter prep (call once at model init, NOT per forward).
# ---------------------------------------------------------------------------
def prepare_linear_hardsigmoid_params(weight, bias):
    """weight: (OUT, IN) PyTorch layout, bias: (OUT,).

    Returns (w_t, b_fold, out_features):
      w_t    : (K, Np) f32  -- transposed to K-major, N zero-padded to a lane multiple
      b_fold : (1, Np) f32  -- bias with the "+3" already folded in, zero-padded
    """
    out_features, k = weight.shape
    n_padded = _round_up(out_features, 128)  # lane-dense output columns
    w_t = (
        jnp.zeros((k, n_padded), jnp.float32)
        .at[:, :out_features]
        .set(weight.astype(jnp.float32).T)
    )
    b_fold = (
        jnp.zeros((1, n_padded), jnp.float32)
        .at[0, :out_features]
        .set(bias.astype(jnp.float32) + 3.0)
    )
    return w_t, b_fold, out_features


# ---------------------------------------------------------------------------
# Kernel
# ---------------------------------------------------------------------------
def _linear_hardsigmoid_kernel(x_ref, w_ref, b_ref, o_ref, *, compute_dtype):
    # x_ref: (tm, tk) activations
    # w_ref: (tk, tn) pre-transposed weight -> plain MXU contraction
    # b_ref: (1,  tn) bias with the "+3" folded in
    # o_ref: (tm, tn) f32 output tile; doubles as the resident accumulator
    k = pl.program_id(2)

    lhs = x_ref[...]
    rhs = w_ref[...]
    if lhs.dtype != compute_dtype:
        lhs = lhs.astype(compute_dtype)
    if rhs.dtype != compute_dtype:
        rhs = rhs.astype(compute_dtype)

    partial = jnp.dot(lhs, rhs, preferred_element_type=jnp.float32)

    @pl.when(k == 0)
    def _():
        o_ref[...] = partial          # overwrite: no zero-fill, no RMW on first k step

    @pl.when(k > 0)
    def _():
        o_ref[...] += partial

    @pl.when(k == pl.num_programs(2) - 1)
    def _():
        acc = o_ref[...] + b_ref[...]                      # bias already includes the +3
        o_ref[...] = jnp.clip(acc, 0.0, 6.0) * (1.0 / 6.0)  # mul instead of div


# ---------------------------------------------------------------------------
# Forward wrapper (per-call path touches only the activation)
# ---------------------------------------------------------------------------
def linear_hardsigmoid(x, w_t, b_fold, out_features, *, compute_dtype=jnp.float32):
    """x: (B, K); w_t: (K, Np) pre-transposed/padded; b_fold: (1, Np)."""
    batch, k_dim = x.shape
    k_padded, n_padded = w_t.shape
    assert k_padded == k_dim, "prepared weight K must match activation K"

    # bf16 packs two rows per sublane -> round M/tm to 16 in that case.
    sublane = 16 if (compute_dtype == jnp.bfloat16 or x.dtype == jnp.bfloat16) else 8

    m0 = _round_up(batch, sublane)
    tm = min(m0, 512)
    m_padded = _round_up(m0, tm)

    tn = n_padded if n_padded <= 512 else _pick_divisor(n_padded, (512, 384, 256, 128))
    tk = k_padded if k_padded <= 2048 else _pick_divisor(k_padded, (2048, 1024, 512, 256, 128))

    # Pad only the M tail (no K padding, no full activation copy when already aligned).
    if m_padded == batch:
        x_p = x
    else:
        x_p = jnp.zeros((m_padded, k_dim), x.dtype).at[:batch, :].set(x)

    grid = (m_padded // tm, n_padded // tn, k_padded // tk)

    # Explicit VMEM budget: double-buffered x/W/out blocks + bias, capped for v7x (64 MiB).
    blk_bytes = (tm * tk * x_p.dtype.itemsize) + (tk * tn * 4) + (tm * tn * 4)
    need = 2 * blk_bytes + tn * 4
    vmem_limit_bytes = int(min(48 * 1024 * 1024, max(32 * 1024 * 1024, 2 * need)))

    out_p = pl.pallas_call(
        functools.partial(_linear_hardsigmoid_kernel, compute_dtype=compute_dtype),
        out_shape=jax.ShapeDtypeStruct((m_padded, n_padded), jnp.float32),
        grid=grid,
        in_specs=[
            pl.BlockSpec((tm, tk), lambda i, j, k: (i, k)),  # x tile
            pl.BlockSpec((tk, tn), lambda i, j, k: (k, j)),  # W tile (K-major, pre-transposed)
            pl.BlockSpec((1, tn), lambda i, j, k: (0, j)),   # folded bias tile
        ],
        out_specs=pl.BlockSpec((tm, tn), lambda i, j, k: (i, j)),
        compiler_params=pltpu.CompilerParams(
            dimension_semantics=("parallel", "parallel", "arbitrary"),
            vmem_limit_bytes=vmem_limit_bytes,
        ),
    )(x_p, w_t, b_fold)

    return out_p[:batch, :out_features]


if __name__ == "__main__":
    key = jax.random.PRNGKey(0)
    k_x, k_w, k_b = jax.random.split(key, 3)

    B, IN, OUT = 1, 16, 3

    # Deterministic parameter init (mimics nn.Linear's uniform(-1/sqrt(IN), 1/sqrt(IN)))
    bound = 1.0 / jnp.sqrt(jnp.float32(IN))
    weight = jax.random.uniform(k_w, (OUT, IN), jnp.float32, -bound, bound)
    bias = jax.random.uniform(k_b, (OUT,), jnp.float32, -bound, bound)

    x2 = jax.random.normal(k_x, (B, IN), jnp.float32)

    # One-time constant prep (model init), outside the per-call path.
    w_t, b_fold, out_features = prepare_linear_hardsigmoid_params(weight, bias)

    out = linear_hardsigmoid(x2, w_t, b_fold, out_features)
    out = jax.block_until_ready(out)

    # Reference in plain JAX (matches PyTorch: (linear(x) + 3).clamp(0, 6) / 6)
    ref = jnp.clip(x2 @ weight.T + bias + 3.0, 0.0, 6.0) / 6.0
    assert out.shape == (B, OUT)
    assert jnp.allclose(out, ref, atol=1e-5, rtol=1e-5)

    print("KERNEL_OK")
</pallas_src>

<mosaic_0001>
module attributes {stable_mosaic.version = 11 : i64} {
  func.func @_linear_hardsigmoid_kernel(%arg0: i32, %arg1: i32, %arg2: i32, %arg3: memref<8x16xf32, #tpu.memory_space<vmem>>, %arg4: memref<16x128xf32, #tpu.memory_space<vmem>>, %arg5: memref<1x128xf32, #tpu.memory_space<vmem>>, %arg6: memref<8x128xf32, #tpu.memory_space<vmem>>) attributes {dimension_semantics = [#tpu.dimension_semantics<parallel>, #tpu.dimension_semantics<parallel>, #tpu.dimension_semantics<arbitrary>], iteration_bounds = array<i64: 1, 1, 1>, scalar_prefetch = 0 : i64, scratch_operands = 0 : i64, tpu.core_type = #tpu.core_type<tc>, window_params = [{transform_indices = @transform_0, window_bounds = array<i64: 8, 16>}, {transform_indices = @transform_1, window_bounds = array<i64: 16, 128>}, {transform_indices = @transform_2, window_bounds = array<i64: 1, 128>}, {transform_indices = @transform_3, window_bounds = array<i64: 8, 128>}]} {
    %c0 = arith.constant 0 : index
    %c0_0 = arith.constant 0 : index
    %0 = vector.load %arg3[%c0, %c0_0] : memref<8x16xf32, #tpu.memory_space<vmem>>, vector<8x16xf32>
    %c0_1 = arith.constant 0 : index
    %c0_2 = arith.constant 0 : index
    %1 = vector.load %arg4[%c0_1, %c0_2] : memref<16x128xf32, #tpu.memory_space<vmem>>, vector<16x128xf32>
    %cst = arith.constant dense<0.000000e+00> : vector<8x128xf32>
    %2 = tpu.matmul %0, %1, %cst {dimension_numbers = #tpu.dot_dimension_numbers<[1], [0], [0], [1], [0, 0, 1, 1], [], []>} : vector<8x16xf32>, vector<16x128xf32>, vector<8x128xf32> -> vector<8x128xf32>
    %c0_i32 = arith.constant 0 : i32
    %3 = arith.cmpi eq, %arg2, %c0_i32 : i32
    %4 = arith.extui %3 : i1 to i32
    %c0_i32_3 = arith.constant 0 : i32
    %5 = arith.cmpi ne, %4, %c0_i32_3 : i32
    scf.if %5 {
      %c0_8 = arith.constant 0 : index
      %c0_9 = arith.constant 0 : index
      %12 = vector.load %arg6[%c0_8, %c0_9] : memref<8x128xf32, #tpu.memory_space<vmem>>, vector<8x128xf32>
      tpu.vector_store %arg6[%c0_8, %c0_9], %2 {strides = array<i32>} : memref<8x128xf32, #tpu.memory_space<vmem>>, vector<8x128xf32>,
    } else {
    }
    %c0_i32_4 = arith.constant 0 : i32
    %6 = arith.cmpi sgt, %arg2, %c0_i32_4 : i32
    %7 = arith.extui %6 : i1 to i32
    %c0_i32_5 = arith.constant 0 : i32
    %8 = arith.cmpi ne, %7, %c0_i32_5 : i32
    scf.if %8 {
      %c0_8 = arith.constant 0 : index
      %c0_9 = arith.constant 0 : index
      %12 = vector.load %arg6[%c0_8, %c0_9] : memref<8x128xf32, #tpu.memory_space<vmem>>, vector<8x128xf32>
      %13 = arith.addf %12, %2 : vector<8x128xf32>
      %c0_10 = arith.constant 0 : index
      %c0_11 = arith.constant 0 : index
      %14 = vector.load %arg6[%c0_10, %c0_11] : memref<8x128xf32, #tpu.memory_space<vmem>>, vector<8x128xf32>
      tpu.vector_store %arg6[%c0_10, %c0_11], %13 {strides = array<i32>} : memref<8x128xf32, #tpu.memory_space<vmem>>, vector<8x128xf32>,
    } else {
    }
    %c0_i32_6 = arith.constant 0 : i32
    %9 = arith.cmpi eq, %arg2, %c0_i32_6 : i32
    %10 = arith.extui %9 : i1 to i32
    %c0_i32_7 = arith.constant 0 : i32
    %11 = arith.cmpi ne, %10, %c0_i32_7 : i32
    scf.if %11 {
      %c0_8 = arith.constant 0 : index
      %c0_9 = arith.constant 0 : index
      %12 = vector.load %arg6[%c0_8, %c0_9] : memref<8x128xf32, #tpu.memory_space<vmem>>, vector<8x128xf32>
      %c0_10 = arith.constant 0 : index
      %c0_11 = arith.constant 0 : index
      %13 = vector.load %arg5[%c0_10, %c0_11] : memref<1x128xf32, #tpu.memory_space<vmem>>, vector<1x128xf32>
      %14 = vector.broadcast %13 : vector<1x128xf32> to vector<8x128xf32>
      %15 = arith.addf %12, %14 : vector<8x128xf32>
      %cst_12 = arith.constant 0.000000e+00 : f32
      %cst_13 = arith.constant 6.000000e+00 : f32
      %16 = vector.broadcast %cst_12 : f32 to vector<8x128xf32>
      %17 = arith.maximumf %16, %15 : vector<8x128xf32>
      %18 = vector.broadcast %cst_13 : f32 to vector<8x128xf32>
      %19 = arith.minimumf %18, %17 : vector<8x128xf32>
      %cst_14 = arith.constant 0.166666672 : f32
      %20 = vector.broadcast %cst_14 : f32 to vector<8x128xf32>
      %21 = arith.mulf %19, %20 : vector<8x128xf32>
      %c0_15 = arith.constant 0 : index
      %c0_16 = arith.constant 0 : index
      %22 = vector.load %arg6[%c0_15, %c0_16] : memref<8x128xf32, #tpu.memory_space<vmem>>, vector<8x128xf32>
      tpu.vector_store %arg6[%c0_15, %c0_16], %21 {strides = array<i32>} : memref<8x128xf32, #tpu.memory_space<vmem>>, vector<8x128xf32>,
    } else {
    }
    return
  }
  func.func @transform_0(%arg0: i32, %arg1: i32, %arg2: i32) -> (i32, i32) {
    %c0_i32 = arith.constant 0 : i32
    return %arg0, %arg2 : i32, i32
  }
  func.func @transform_1(%arg0: i32, %arg1: i32, %arg2: i32) -> (i32, i32) {
    %c0_i32 = arith.constant 0 : i32
    return %arg2, %arg1 : i32, i32
  }
  func.func @transform_2(%arg0: i32, %arg1: i32, %arg2: i32) -> (i32, i32) {
    %c0_i32 = arith.constant 0 : i32
    %c0_i32_0 = arith.constant 0 : i32
    return %c0_i32, %arg1 : i32, i32
  }
  func.func @transform_3(%arg0: i32, %arg1: i32, %arg2: i32) -> (i32, i32) {
    %c0_i32 = arith.constant 0 : i32
    return %arg0, %arg1 : i32, i32
  }
}

</mosaic_0001>

<llo_original>
// kernel: tpu_custom_call.1
$region0: #{tpu_custom_call.1}
  #allocation0 [shape = 'u32[]', space=smem, size = 0x4, offset = 0x4, fixed_abs, tag = 'smem constant byte address 0x4 - core index']
  #allocation1 [shape = 'u32[144,128]{1,0:T(1,128)}', space=vmem, size = 0x12000, scoped, tag = 'internal scratch']
  %s0 = inlined_call_operand.hbm [shape: f32[8,16], index: 0, kind: input, shape index: {}]
  %s1 = inlined_call_operand.hbm [shape: f32[16,128], index: 1, kind: input, shape index: {}]
  %s2 = inlined_call_operand.vmem [shape: f32[1,128], index: 2, kind: input, shape index: {}]
  %s3 = inlined_call_operand.hbm [shape: f32[8,128], index: 3, kind: output, shape index: {}]
  %s4 = sld [smem:[#allocation0]]
  $region42: #{tpu_custom_call.1} parent=0
    _
  %s6 = ssub.s32 1, %s4
  %s7 = scalar_select 0, %s6, %s4
  $region1: #{tpu_custom_call.1} parent=0
    #allocation2 [shape = 'u8[4096]{0}', space=vmem, size = 0x1000, scoped, tag = 'input window, operand 0, single buffered']
    #allocation3 [shape = 's32[1]{0}', space=sflag, size = 0x4, scoped, tag = 'scoped memory for tpu_custom_call.1']
    #allocation4 [shape = 's32[1]{0}', space=sflag, size = 0x4, scoped, tag = 'scoped memory for tpu_custom_call.1']
    #allocation5 [shape = 'u8[8192]{0}', space=vmem, size = 0x2000, scoped, tag = 'input window, operand 1, single buffered']
    #allocation6 [shape = 's32[1]{0}', space=sflag, size = 0x4, scoped, tag = 'scoped memory for tpu_custom_call.1']
    #allocation7 [shape = 'u8[4096]{0}', space=vmem, size = 0x1000, scoped, tag = 'output window, operand 0, single buffered']
    %8 = vsyncpa [#allocation3], 0
    %9 = vsyncpa [#allocation6], 0
    %10 = vsyncpa [#allocation4], 0
    // Predicated region
    $region2: #{tpu_custom_call.1} parent=1 // pred_check
      _
    $region3: #{tpu_custom_call.1} parent=1 // pred_check_branch
      %12 = sbr.rel (0) target = $region5
    $region4: #{tpu_custom_call.1} parent=1 // pred_region
      %s14 = ssub.s32 128, 128
      %15 = vsyncadd [#allocation3], %s14
      %s17 = sshll.u32 [#allocation2], 4
      %s18 = int_to_ptr.vmem [resolvable:$true] %s17
      %20 = dma.hbm_to_vmem [thread:$0]  %s0, 128, %s18, [#allocation3]
    $region5: #{tpu_custom_call.1} parent=1 // pred_fallthru
      _
    // Predicated region
    $region6: #{tpu_custom_call.1} parent=1 // pred_check
      _
    $region7: #{tpu_custom_call.1} parent=1 // pred_check_branch
      %22 = sbr.rel (0) target = $region9
    $region8: #{tpu_custom_call.1} parent=1 // pred_region
      %s24 = ssub.s32 256, 256
      %25 = vsyncadd [#allocation6], %s24
      %s26 = sshll.u32 [#allocation5], 4
      %s27 = int_to_ptr.vmem [resolvable:$true] %s26
      %32 = dma.hbm_to_vmem [thread:$0]  %s1, 256, %s27, [#allocation6], 128, 128, 8
    $region9: #{tpu_custom_call.1} parent=1 // pred_fallthru
      _
    // Predicated region
    $region10: #{tpu_custom_call.1} parent=1 // pred_check
      _
    $region11: #{tpu_custom_call.1} parent=1 // pred_check_branch
      %34 = sbr.rel (0) target = $region13
    $region12: #{tpu_custom_call.1} parent=1 // pred_region
      _
    $region13: #{tpu_custom_call.1} parent=1 // pred_fallthru
      _
    // Predicated region
    $region14: #{tpu_custom_call.1} parent=1 // pred_check
      _
    $region15: #{tpu_custom_call.1} parent=1 // pred_check_branch
      %36 = sbr.rel (0) target = $region17
    $region16: #{tpu_custom_call.1} parent=1 // pred_region
      %37 = dma.done [#allocation3], 128
    $region17: #{tpu_custom_call.1} parent=1 // pred_fallthru
      _
    // Predicated region
    $region18: #{tpu_custom_call.1} parent=1 // pred_check
      _
    $region19: #{tpu_custom_call.1} parent=1 // pred_check_branch
      %39 = sbr.rel (0) target = $region21
    $region20: #{tpu_custom_call.1} parent=1 // pred_region
      %40 = dma.done [#allocation6], 256
    $region21: #{tpu_custom_call.1} parent=1 // pred_fallthru
      _
    %v41 = vld [vmem:[#allocation2] sm:$0xff]
    %v42 = vld [vmem:[#allocation5] sm:$0xff]
    %v43 = vld [vmem:[#allocation5 + $0x8] sm:$0xff]
    %vm44 = vcmask 130048
    %v46 = vsel %vm44, %v41, 0
    %48 = vmatprep.subr.mxu0 0.0
    %49 = vmatpush1.msra.mxu0 0.0
    %50 = vmatprep.subr.mxu0 0.0
    %51 = vmatpush1.msra.mxu0 0.0
    %52 = vmatprep.subr.mxu0 0.0
    %53 = vmatpush1.msra.mxu0 0.0
    %54 = vmatprep.subr.mxu0 0.0
    %55 = vmatpush1.msra.mxu0 0.0
    %56 = vmatprep.subr.mxu0 0.0
    %57 = vmatpush1.msra.mxu0 0.0
    %58 = vmatprep.subr.mxu0 0.0
    %59 = vmatpush1.msra.mxu0 0.0
    %60 = vmatprep.subr.mxu0 0.0
    %61 = vmatpush1.msra.mxu0 0.0
    %62 = vmatprep.subr.mxu0 0.0
    %63 = vmatpush1.msra.mxu0 0.0
    %64 = vmatprep.subr.mxu0 0.0
    %65 = vmatpush1.msra.mxu0 0.0
    %66 = vmatprep.subr.mxu0 0.0
    %67 = vmatpush1.msra.mxu0 0.0
    %68 = vmatprep.subr.mxu0 0.0
    %69 = vmatpush1.msra.mxu0 0.0
    %70 = vmatprep.subr.mxu0 0.0
    %71 = vmatpush1.msra.mxu0 0.0
    %72 = vmatprep.subr.mxu0 0.0
    %73 = vmatpush1.msra.mxu0 0.0
    %74 = vmatprep.subr.mxu0 0.0
    %75 = vmatpush1.msra.mxu0 0.0
    %76 = vmatprep.subr.mxu0 0.0
    %77 = vmatpush1.msra.mxu0 %v43
    %78 = vmatprep.subr.mxu0 0.0
    %79 = vmatpush1.msra.mxu0 %v42
    %80 = vmatprep.subr.mxu0 0.0
    %81 = vmatpush2.msra.mxu0 0.0
    %82 = vmatprep.subr.mxu0 0.0
    %83 = vmatpush2.msra.mxu0 0.0
    %84 = vmatprep.subr.mxu0 0.0
    %85 = vmatpush2.msra.mxu0 0.0
    %86 = vmatprep.subr.mxu0 0.0
    %87 = vmatpush2.msra.mxu0 0.0
    %88 = vmatprep.subr.mxu0 0.0
    %89 = vmatpush2.msra.mxu0 0.0
    %90 = vmatprep.subr.mxu0 0.0
    %91 = vmatpush2.msra.mxu0 0.0
    %92 = vmatprep.subr.mxu0 0.0
    %93 = vmatpush2.msra.mxu0 0.0
    %94 = vmatprep.subr.mxu0 0.0
    %95 = vmatpush2.msra.mxu0 0.0
    %96 = vmatprep.subr.mxu0 0.0
    %97 = vmatpush2.msra.mxu0 0.0
    %98 = vmatprep.subr.mxu0 0.0
    %99 = vmatpush2.msra.mxu0 0.0
    %100 = vmatprep.subr.mxu0 0.0
    %101 = vmatpush2.msra.mxu0 0.0
    %102 = vmatprep.subr.mxu0 0.0
    %103 = vmatpush2.msra.mxu0 0.0
    %104 = vmatprep.subr.mxu0 0.0
    %105 = vmatpush2.msra.mxu0 0.0
    %106 = vmatprep.subr.mxu0 0.0
    %107 = vmatpush2.msra.mxu0 0.0
    %108 = vmatprep.subr.mxu0 0.0
    %109 = vmatpush2.msra.mxu0 0.0
    %110 = vmatprep.subr.mxu0 0.0
    %111 = vmatpush2.msra.mxu0 0.0
    %112 = vmatprep.mubr.f32.mxu0 0.0
    %113 = vmatmul.mubr.f32.gmra.mxu0 %v46
    %v114 = vpop.f32.mrf.mxu0
    %v115 = vadd.f32 0.0, %v114
    %v116 = vpop.f32.mrf.mxu0
    %117 = vdwg.mxu0
    %p118 = scmp.eq.s32.totalorder 0, 0
    // Predicated region
    $region22: #{tpu_custom_call.1} parent=1 // pred_check
      %p119 = pneg %p118
    $region23: #{tpu_custom_call.1} parent=1 // pred_check_branch
      %121 = sbr.rel (%p119) target = $region25
    $region24: #{tpu_custom_call.1} parent=1 // pred_region
      %122 = vst [vmem:[#allocation7] sm:$0xff] %v115
    $region25: #{tpu_custom_call.1} parent=1 // pred_fallthru
      _
    %p123 = scmp.gt.s32.totalorder 0, 0
    // Predicated region
    $region26: #{tpu_custom_call.1} parent=1 // pred_check
      %p124 = pneg %p123
    $region27: #{tpu_custom_call.1} parent=1 // pred_check_branch
      %126 = sbr.rel (%p124) target = $region29
    $region28: #{tpu_custom_call.1} parent=1 // pred_region
      %v127 = vld [vmem:[#allocation7] sm:$0xff]
      %v128 = vadd.f32 %v127, %v115
      %129 = vst [vmem:[#allocation7] sm:$0xff] %v128
    $region29: #{tpu_custom_call.1} parent=1 // pred_fallthru
      _
    // Predicated region
    $region30: #{tpu_custom_call.1} parent=1 // pred_check
      %p130 = pneg %p118
    $region31: #{tpu_custom_call.1} parent=1 // pred_check_branch
      %132 = sbr.rel (%p130) target = $region33
    $region32: #{tpu_custom_call.1} parent=1 // pred_region
      %v133 = vld [vmem:[#allocation7] sm:$0xff]
      %v134 = vld [vmem:[%s2] sm:$0x1]
      %v136 = vlaneseq
      %v137 = vshrl.u32 %v136, 7
      %v138 = vsub.s32 0, %v137
      %v139 = vrot.slane %v134, %v138
      %v141 = vadd.f32 %v133, %v139
      %v142 = vmax.f32 %v141, 0.0
      %v143 = vmin.f32 %v142, 6.0
      %v144 = vmul.f32 %v143, 0.16666667
      %145 = vst [vmem:[#allocation7] sm:$0xff] %v144
    $region33: #{tpu_custom_call.1} parent=1 // pred_fallthru
      _
    // Predicated region
    $region34: #{tpu_custom_call.1} parent=1 // pred_check
      _
    $region35: #{tpu_custom_call.1} parent=1 // pred_check_branch
      %147 = sbr.rel (0) target = $region37
    $region36: #{tpu_custom_call.1} parent=1 // pred_region
      %s149 = ssub.s32 128, 128
      %150 = vsyncadd [#allocation4], %s149
      %s152 = sshll.u32 [#allocation7], 4
      %s153 = int_to_ptr.vmem [resolvable:$true] %s152
      %155 = dma.vmem_to_hbm [thread:$0]  %s153, 128, %s3, [#allocation4]
    $region37: #{tpu_custom_call.1} parent=1 // pred_fallthru
      _
    // Predicated region
    $region38: #{tpu_custom_call.1} parent=1 // pred_check
      _
    $region39: #{tpu_custom_call.1} parent=1 // pred_check_branch
      %157 = sbr.rel (0) target = $region41
    $region40: #{tpu_custom_call.1} parent=1 // pred_region
      %158 = dma.done [#allocation4], 128
    $region41: #{tpu_custom_call.1} parent=1 // pred_fallthru
      _
    %159 = vsyncpa [#allocation3], 1
    %160 = vsyncpa [#allocation6], 1
    %161 = vsyncpa [#allocation4], 1

</llo_original>
